<compile_context>
chip_gen: v6e
topology: v6e:2x2x1
jax: 0.10.0
libtpu: 0.0.40
codegen_flags: <defaults>
</compile_context>

<pallas_src>
import jax
import jax.numpy as jnp
import numpy as np
from jax.experimental import pallas as pl
from jax.experimental.pallas import tpu as pltpu

LANE = 128
EPS = 1e-5
SLOPE = 0.2


def _round_up(x, m):
    return (x + m - 1) // m * m


def _vmem_limit_bytes():
    cap = 64 * 1024 * 1024  # conservative default (v7x per-TensorCore VMEM)
    try:
        info_cap = int(pltpu.get_tpu_info().vmem_capacity_bytes)
        if info_cap > 0:
            cap = info_cap
    except Exception:
        pass
    # Leave headroom for compiler-internal scratch:
    # v5e/v6e (128 MiB physical) -> 96 MiB, v7x (64 MiB) -> 48 MiB.
    return max(32 * 1024 * 1024, min(cap * 3 // 4, 96 * 1024 * 1024))


def _pick_tm(M, K, Coutp, vmem_limit):
    # Budget for double-buffered pass-1 blocks:
    #   patches (tm,K) bf16 x2 bufs + conv out (tm,Coutp) bf16 x2 bufs
    #   + grid-invariant weights (K,Coutp) bf16 (counted x2 bufs)
    #   + two (8,Coutp) fp32 stat blocks x2 bufs.
    budget = int(vmem_limit * 0.55)
    fixed = 2 * K * Coutp * 2 + 4 * 8 * Coutp * 4
    per_row = 2 * (K + Coutp) * 2
    tm = (budget - fixed) // per_row if budget > fixed else 128
    tm = int(max(128, min(1024, tm)))
    # Keep >= 2 tiles so the "parallel" M axis shards across both v7x TCs.
    if M > 16:
        tm = min(tm, _round_up(pl.cdiv(M, 2), 16))
    return max(16, (tm // 16) * 16)


def _pick_pass2_factor(num_tiles, tm, Coutp, vmem_limit):
    # Pass 2 is mem-bound: coarsen tiles (fewer grid steps) while keeping
    # >= 2 steps for megacore and staying inside the VMEM budget.
    budget = int(vmem_limit * 0.55)
    for f in (8, 4, 2):
        rows = f * tm
        if (num_tiles % f == 0 and num_tiles // f >= 2 and rows <= 4096
                and 2 * rows * Coutp * (2 + 4) <= budget):
            return f
    return 1


# ---------------- Pass 1: tiled conv matmul + per-tile partial BN stats ------

def conv_stats_kernel(patches_ref, w_ref, conv_ref, sum_ref, sumsq_ref):
    # (tm, K) bf16 @ (K, Coutp) bf16 with fp32 accumulation on the MXU.
    conv = jnp.dot(patches_ref[...], w_ref[...], preferred_element_type=jnp.float32)
    # bf16 intermediate: halves inter-pass HBM write + re-read traffic.
    conv_ref[...] = conv.astype(conv_ref.dtype)
    # Partial statistics as aligned (8, Coutp) blocks: fold tm rows onto 8
    # sublanes with vreg-wise VPU adds (no deep XLU sublane reduction, no
    # masked sub-(8,128) stores). Finalized in the wrapper.
    tm, coutp = conv.shape
    c3 = conv.reshape(tm // 8, 8, coutp)
    sum_ref[...] = jnp.sum(c3, axis=0)
    sumsq_ref[...] = jnp.sum(c3 * c3, axis=0)


# ---------------- Pass 2: fused normalize (pre-folded scale/bias) + LeakyReLU

def bn_lrelu_kernel(conv_ref, scale_ref, bias_ref, out_ref):
    # Upcast bf16 conv to fp32 before the affine (v5e VPU has no bf16 path).
    y = conv_ref[...].astype(jnp.float32) * scale_ref[...] + bias_ref[...]
    out_ref[...] = jnp.where(y >= 0, y, SLOPE * y).astype(out_ref.dtype)


# ---------------- Wrapper -----------------------------------------------------

def cnn_block_forward(x_nchw, weight_oihw, gamma, beta, *, stride=2, tm=None):
    """Pallas implementation of CNNBlock.forward. x: NCHW fp32, weight: OIHW."""
    N, Cin, H, W = x_nchw.shape
    Cout, _, KH, KW = weight_oihw.shape

    # Reflect pad (padding=1, padding_mode='reflect'); NHWC for lane-dense
    # channels; cast to bf16 *before* building patches so the im2col glue moves
    # half the bytes and there is no separate fp32->bf16 pass over (M, K).
    xp = jnp.pad(x_nchw, ((0, 0), (0, 0), (1, 1), (1, 1)), mode="reflect")
    xp = jnp.transpose(xp, (0, 2, 3, 1)).astype(jnp.bfloat16)

    Ho = (H + 2 - KH) // stride + 1
    Wo = (W + 2 - KW) // stride + 1

    # im2col glue: (N*Ho*Wo, KH*KW*Cin), column order (kh, kw, cin).
    cols = []
    for kh in range(KH):
        for kw in range(KW):
            cols.append(xp[:, kh:kh + stride * Ho:stride, kw:kw + stride * Wo:stride, :])
    patches = jnp.concatenate(cols, axis=-1).reshape(N * Ho * Wo, KH * KW * Cin)

    M_real, K = patches.shape

    # Lane-dense output channels: pad Cout to a multiple of 128 with zero columns.
    Coutp = _round_up(Cout, LANE)
    w2d = jnp.transpose(weight_oihw, (2, 3, 1, 0)).reshape(K, Cout)
    w2d = jnp.pad(w2d, ((0, 0), (0, Coutp - Cout))).astype(jnp.bfloat16)

    vmem_limit = _vmem_limit_bytes()
    if tm is None:
        tm = _pick_tm(M_real, K, Coutp, vmem_limit)
    tm = max(16, _round_up(int(tm), 16))   # bf16-friendly sublane multiple

    # Tile M; pad with zero rows so per-tile partial stats stay exact
    # (zero rows contribute 0 to the sums; true M is the divisor).
    Mp = _round_up(M_real, tm)
    if Mp != M_real:
        patches = jnp.pad(patches, ((0, Mp - M_real), (0, 0)))
    num_tiles = Mp // tm

    cparams = pltpu.CompilerParams(
        dimension_semantics=("parallel",),   # independent M tiles -> megacore / 2 TCs
        vmem_limit_bytes=vmem_limit,
    )

    conv, psum, psumsq = pl.pallas_call(
        conv_stats_kernel,
        out_shape=(
            jax.ShapeDtypeStruct((Mp, Coutp), jnp.bfloat16),            # bf16 intermediate
            jax.ShapeDtypeStruct((num_tiles * 8, Coutp), jnp.float32),  # partial sums
            jax.ShapeDtypeStruct((num_tiles * 8, Coutp), jnp.float32),  # partial sumsq
        ),
        grid=(num_tiles,),
        in_specs=[
            pl.BlockSpec((tm, K), lambda i: (i, 0)),
            pl.BlockSpec((K, Coutp), lambda i: (0, 0)),   # grid-invariant weights
        ],
        out_specs=(
            pl.BlockSpec((tm, Coutp), lambda i: (i, 0)),
            pl.BlockSpec((8, Coutp), lambda i: (i, 0)),
            pl.BlockSpec((8, Coutp), lambda i: (i, 0)),
        ),
        compiler_params=cparams,
    )(patches, w2d)

    # Finalize global BN stats (training-mode biased stats over N*Ho*Wo) and fold
    # gamma/beta into a single per-channel scale/bias (tiny per-channel JAX math).
    total = jnp.sum(psum, axis=0)
    totalsq = jnp.sum(psumsq, axis=0)
    mean = total / M_real
    var = jnp.maximum(totalsq / M_real - mean * mean, 0.0)  # fp32 E[x^2] - mean^2
    inv_std = jax.lax.rsqrt(var + EPS)
    gamma_p = jnp.pad(gamma, (0, Coutp - Cout))
    beta_p = jnp.pad(beta, (0, Coutp - Cout))
    scale = (gamma_p * inv_std).reshape(1, Coutp).astype(jnp.float32)
    bias = (beta_p - mean * gamma_p * inv_std).reshape(1, Coutp).astype(jnp.float32)

    # Pass 2: purely mem-bound; use coarser tiles to amortize per-step overhead.
    f = _pick_pass2_factor(num_tiles, tm, Coutp, vmem_limit)
    tm2 = tm * f
    num_tiles2 = num_tiles // f

    out2d = pl.pallas_call(
        bn_lrelu_kernel,
        out_shape=jax.ShapeDtypeStruct((Mp, Coutp), jnp.float32),
        grid=(num_tiles2,),
        in_specs=[
            pl.BlockSpec((tm2, Coutp), lambda i: (i, 0)),
            pl.BlockSpec((1, Coutp), lambda i: (0, 0)),
            pl.BlockSpec((1, Coutp), lambda i: (0, 0)),
        ],
        out_specs=pl.BlockSpec((tm2, Coutp), lambda i: (i, 0)),
        compiler_params=cparams,
    )(conv, scale, bias)

    # TODO(synk): if the surrounding model can consume NHWC, drop this slice +
    # transpose (a full extra read+write of the output in XLA); kept to match
    # the PyTorch module's NCHW contract.
    out = out2d[:M_real, :Cout].reshape(N, Ho, Wo, Cout)
    return jnp.transpose(out, (0, 3, 1, 2))


# ---------------- Pure-JAX fp32 reference (PyTorch training-mode forward) ----

def cnn_block_reference(x, w, gamma, beta, *, stride=2, eps=EPS, slope=SLOPE):
    xp = jnp.pad(x, ((0, 0), (0, 0), (1, 1), (1, 1)), mode="reflect")
    conv = jax.lax.conv_general_dilated(
        xp, w, window_strides=(stride, stride), padding="VALID",
        dimension_numbers=("NCHW", "OIHW", "NCHW"),
    )
    mean = conv.mean(axis=(0, 2, 3), keepdims=True)
    var = ((conv - mean) ** 2).mean(axis=(0, 2, 3), keepdims=True)
    y = (conv - mean) * jax.lax.rsqrt(var + eps)
    y = y * gamma.reshape(1, -1, 1, 1) + beta.reshape(1, -1, 1, 1)
    return jnp.where(y >= 0, y, slope * y)


if __name__ == "__main__":
    N, Cin, Cout, H, W = 2, 4, 8, 16, 16

    key = jax.random.PRNGKey(0)
    kx, kw, kg, kb = jax.random.split(key, 4)

    x = jax.random.normal(kx, (N, Cin, H, W), dtype=jnp.float32)
    weight = 0.1 * jax.random.normal(kw, (Cout, Cin, 4, 4), dtype=jnp.float32)
    gamma = 1.0 + 0.1 * jax.random.normal(kg, (Cout,), dtype=jnp.float32)
    beta = 0.1 * jax.random.normal(kb, (Cout,), dtype=jnp.float32)

    ref = jax.block_until_ready(cnn_block_reference(x, weight, gamma, beta))

    # Default (budget-driven TM, >=2 tiles) path.
    out = jax.block_until_ready(cnn_block_forward(x, weight, gamma, beta))
    # Tolerance reflects the deliberate bf16 MXU-input / bf16 intermediate policy
    # (fp32 accumulation + fp32 statistics).
    np.testing.assert_allclose(np.asarray(out), np.asarray(ref), rtol=5e-2, atol=5e-2)

    # Multi-tile path: exercises grid > 1, cross-tile BN stat accumulation, and
    # the coarser pass-2 tiling (4 pass-1 tiles -> 2 pass-2 tiles).
    out_mt = jax.block_until_ready(cnn_block_forward(x, weight, gamma, beta, tm=32))
    np.testing.assert_allclose(np.asarray(out_mt), np.asarray(ref), rtol=5e-2, atol=5e-2)

    print("KERNEL_OK")
</pallas_src>

<mosaic_0001>
module attributes {stable_mosaic.version = 11 : i64} {
  func.func @conv_stats_kernel(%arg0: i32, %arg1: memref<64x64xbf16, #tpu.memory_space<vmem>>, %arg2: memref<64x128xbf16, #tpu.memory_space<vmem>>, %arg3: memref<64x128xbf16, #tpu.memory_space<vmem>>, %arg4: memref<8x128xf32, #tpu.memory_space<vmem>>, %arg5: memref<8x128xf32, #tpu.memory_space<vmem>>) attributes {dimension_semantics = [#tpu.dimension_semantics<parallel>], iteration_bounds = array<i64: 2>, scalar_prefetch = 0 : i64, scratch_operands = 0 : i64, tpu.core_type = #tpu.core_type<tc>, window_params = [{transform_indices = @transform_0, window_bounds = array<i64: 64, 64>}, {pipeline_mode = #tpu.pipeline_mode<synchronous>, transform_indices = @transform_1, window_bounds = array<i64: 64, 128>}, {transform_indices = @transform_2, window_bounds = array<i64: 64, 128>}, {transform_indices = @transform_3, window_bounds = array<i64: 8, 128>}, {transform_indices = @transform_4, window_bounds = array<i64: 8, 128>}]} {
    %c0 = arith.constant 0 : index
    %c0_0 = arith.constant 0 : index
    %0 = vector.load %arg1[%c0, %c0_0] : memref<64x64xbf16, #tpu.memory_space<vmem>>, vector<64x64xbf16>
    %c0_1 = arith.constant 0 : index
    %c0_2 = arith.constant 0 : index
    %1 = vector.load %arg2[%c0_1, %c0_2] : memref<64x128xbf16, #tpu.memory_space<vmem>>, vector<64x128xbf16>
    %cst = arith.constant dense<0.000000e+00> : vector<64x128xf32>
    %2 = tpu.matmul %0, %1, %cst {dimension_numbers = #tpu.dot_dimension_numbers<[1], [0], [0], [1], [0, 0, 1, 1], [], []>} : vector<64x64xbf16>, vector<64x128xbf16>, vector<64x128xf32> -> vector<64x128xf32>
    %3 = arith.truncf %2 : vector<64x128xf32> to vector<64x128xbf16>
    %c0_3 = arith.constant 0 : index
    %c0_4 = arith.constant 0 : index
    %4 = vector.load %arg3[%c0_3, %c0_4] : memref<64x128xbf16, #tpu.memory_space<vmem>>, vector<64x128xbf16>
    tpu.vector_store %arg3[%c0_3, %c0_4], %3 {strides = array<i32>} : memref<64x128xbf16, #tpu.memory_space<vmem>>, vector<64x128xbf16>,
    %5 = vector.shape_cast %2 : vector<64x128xf32> to vector<8x8x128xf32>
    %cst_5 = arith.constant dense<0.000000e+00> : vector<8x128xf32>
    %6 = vector.multi_reduction <add>, %5, %cst_5 [0] : vector<8x8x128xf32> to vector<8x128xf32>
    %c0_6 = arith.constant 0 : index
    %c0_7 = arith.constant 0 : index
    %7 = vector.load %arg4[%c0_6, %c0_7] : memref<8x128xf32, #tpu.memory_space<vmem>>, vector<8x128xf32>
    tpu.vector_store %arg4[%c0_6, %c0_7], %6 {strides = array<i32>} : memref<8x128xf32, #tpu.memory_space<vmem>>, vector<8x128xf32>,
    %8 = arith.mulf %5, %5 : vector<8x8x128xf32>
    %cst_8 = arith.constant dense<0.000000e+00> : vector<8x128xf32>
    %9 = vector.multi_reduction <add>, %8, %cst_8 [0] : vector<8x8x128xf32> to vector<8x128xf32>
    %c0_9 = arith.constant 0 : index
    %c0_10 = arith.constant 0 : index
    %10 = vector.load %arg5[%c0_9, %c0_10] : memref<8x128xf32, #tpu.memory_space<vmem>>, vector<8x128xf32>
    tpu.vector_store %arg5[%c0_9, %c0_10], %9 {strides = array<i32>} : memref<8x128xf32, #tpu.memory_space<vmem>>, vector<8x128xf32>,
    return
  }
  func.func @transform_0(%arg0: i32) -> (i32, i32) {
    %c0_i32 = arith.constant 0 : i32
    %c0_i32_0 = arith.constant 0 : i32
    return %arg0, %c0_i32 : i32, i32
  }
  func.func @transform_1(%arg0: i32) -> (i32, i32) {
    %c0_i32 = arith.constant 0 : i32
    %c0_i32_0 = arith.constant 0 : i32
    %c0_i32_1 = arith.constant 0 : i32
    return %c0_i32, %c0_i32_0 : i32, i32
  }
  func.func @transform_2(%arg0: i32) -> (i32, i32) {
    %c0_i32 = arith.constant 0 : i32
    %c0_i32_0 = arith.constant 0 : i32
    return %arg0, %c0_i32 : i32, i32
  }
  func.func @transform_3(%arg0: i32) -> (i32, i32) {
    %c0_i32 = arith.constant 0 : i32
    %c0_i32_0 = arith.constant 0 : i32
    return %arg0, %c0_i32 : i32, i32
  }
  func.func @transform_4(%arg0: i32) -> (i32, i32) {
    %c0_i32 = arith.constant 0 : i32
    %c0_i32_0 = arith.constant 0 : i32
    return %arg0, %c0_i32 : i32, i32
  }
}

</mosaic_0001>

<llo_original>
// kernel: tpu_custom_call.1
$region0: #{tpu_custom_call.1}
  #allocation0 [shape = 'u32[]', space=smem, size = 0x4, offset = 0x4, fixed_abs, tag = 'smem constant byte address 0x4 - core index']
  #allocation1 [shape = 'u32[144,128]{1,0:T(1,128)}', space=vmem, size = 0x12000, scoped, tag = 'internal scratch']
  %s0 = inlined_call_operand.vmem [shape: bf16[128,64], index: 0, kind: input, shape index: {}]
  %s1 = inlined_call_operand.vmem [shape: bf16[64,128], index: 1, kind: input, shape index: {}]
  %s2 = inlined_call_operand.hbm [shape: bf16[128,128], index: 2, kind: output, shape index: {0}]
  %s3 = inlined_call_operand.hbm [shape: f32[16,128], index: 3, kind: output, shape index: {1}]
  %s4 = inlined_call_operand.hbm [shape: f32[16,128], index: 4, kind: output, shape index: {2}]
  %5 = xla_tuple %s2, %s3, %s4
  %s6 = sld [smem:[#allocation0]]
  $region57: #{tpu_custom_call.1} parent=0
    _
  %s8 = ssub.s32 1, %s6
  %s9 = scalar_select 0, %s8, %s6
  $region1: #{tpu_custom_call.1} parent=0
    #allocation2 [shape = 'u8[32768]{0}', space=vmem, size = 0x8000, scoped, tag = 'output window, operand 0']
    #allocation3 [shape = 's32[2]{0}', space=sflag, size = 0x8, scoped, tag = 'scoped memory for tpu_custom_call.1']
    #allocation4 [shape = 'u8[8192]{0}', space=vmem, size = 0x2000, scoped, tag = 'output window, operand 1']
    #allocation5 [shape = 's32[2]{0}', space=sflag, size = 0x8, scoped, tag = 'scoped memory for tpu_custom_call.1']
    #allocation6 [shape = 'u8[8192]{0}', space=vmem, size = 0x2000, scoped, tag = 'output window, operand 2']
    %10 = vsyncpa [#allocation3], 0
    %s11 = scalar_lea.sflag [#allocation3], 1
    %12 = vsyncpa %s11, 0
    %13 = vsyncpa [#allocation5], 0
    %s14 = scalar_lea.sflag [#allocation5], 1
    %15 = vsyncpa %s14, 0
    loop: start=0, step=1, limit=4
    $region2: #{tpu_custom_call.1} parent=1 // loop_pre_header
      _
    $region3: #{tpu_custom_call.1} parent=1 // loop_header
      %s17 = sphi 0, %s21
      %p18 = scmp.ge.s32.totalorder %s17, 4
      %s27 = sphi 0, %s29
      %s30 = sphi 0, %s27
      %s31 = sphi 0, %s30
      %s47 = sphi 0, %s31
      %s51 = sphi 0, %s51
      %s53 = sphi 0, %s51
      %s54 = sphi 0, %s53
      %s68 = sphi 0, %s54
      %s74 = sphi 0, %s76
      %s77 = sphi 0, %s74
      %s78 = sphi 0, %s77
      %s94 = sphi 0, %s78
      %s100 = sphi 0, %s102
      %s103 = sphi 0, %s100
      %s104 = sphi 0, %s103
      %s120 = sphi 0, %s104
      %s126 = sphi 0, %s128
      %s129 = sphi 0, %s126
      %s130 = sphi 0, %s129
      %s146 = sphi 0, %s130
    $region4: #{tpu_custom_call.1} parent=1 // loop_header_branch
      %20 = sbr.rel (%p18) target = $region8
    $region5: #{tpu_custom_call.1} parent=1 // loop_body
      %s22 = ssub.s32 %s17, 1
      %s23 = ssub.s32 %s17, 2
      %s24 = sadd.s32 %s17, 1
      %s25 = ssub.s32 %s17, %s24
      %p26 = scmp.eq.s32.totalorder %s25, 0
      %s28 = sadd.s32 %s27, 1
      %s29 = scalar_select %p26, %s27, %s28
      %p32 = pneg %p26
      %p33 = scmp.eq.s32.totalorder %s17, 1
      %p34 = por %p32, %p33
      %p35 = scmp.ne.s32.totalorder %s27, %s30
      %p36 = scmp.eq.s32.totalorder %s17, 0
      %p37 = por %p35, %p36
      %p38 = scmp.ne.s32.totalorder %s27, %s30
      %p39 = scmp.eq.s32.totalorder %s22, 1
      %p40 = por %p38, %p39
      %p41 = scmp.ne.s32.totalorder %s30, %s31
      %p42 = scmp.eq.s32.totalorder %s22, 0
      %p43 = por %p41, %p42
      %p44 = scmp.ne.s32.totalorder %s30, %s31
      %p45 = scmp.eq.s32.totalorder %s23, 1
      %p46 = por %p44, %p45
      %p48 = scmp.ne.s32.totalorder %s31, %s47
      %p49 = scmp.eq.s32.totalorder %s23, 0
      %p50 = por %p48, %p49
      %s52 = sadd.s32 %s51, 1
      %p55 = scmp.eq.s32.totalorder %s17, 1
      %p56 = scmp.ne.s32.totalorder %s51, %s53
      %p57 = scmp.eq.s32.totalorder %s17, 0
      %p58 = por %p56, %p57
      %p59 = scmp.ne.s32.totalorder %s51, %s53
      %p60 = scmp.eq.s32.totalorder %s22, 1
      %p61 = por %p59, %p60
      %p62 = scmp.ne.s32.totalorder %s53, %s54
      %p63 = scmp.eq.s32.totalorder %s22, 0
      %p64 = por %p62, %p63
      %p65 = scmp.ne.s32.totalorder %s53, %s54
      %p66 = scmp.eq.s32.totalorder %s23, 1
      %p67 = por %p65, %p66
      %p69 = scmp.ne.s32.totalorder %s54, %s68
      %p70 = scmp.eq.s32.totalorder %s23, 0
      %p71 = por %p69, %p70
      %s72 = ssub.s32 %s17, %s24
      %p73 = scmp.eq.s32.totalorder %s72, 0
      %s75 = sadd.s32 %s74, 1
      %s76 = scalar_select %p73, %s74, %s75
      %p79 = pneg %p73
      %p80 = scmp.eq.s32.totalorder %s17, 1
      %p81 = por %p79, %p80
      %p82 = scmp.ne.s32.totalorder %s74, %s77
      %p83 = scmp.eq.s32.totalorder %s17, 0
      %p84 = por %p82, %p83
      %p85 = scmp.ne.s32.totalorder %s74, %s77
      %p86 = scmp.eq.s32.totalorder %s22, 1
      %p87 = por %p85, %p86
      %p88 = scmp.ne.s32.totalorder %s77, %s78
      %p89 = scmp.eq.s32.totalorder %s22, 0
      %p90 = por %p88, %p89
      %p91 = scmp.ne.s32.totalorder %s77, %s78
      %p92 = scmp.eq.s32.totalorder %s23, 1
      %p93 = por %p91, %p92
      %p95 = scmp.ne.s32.totalorder %s78, %s94
      %p96 = scmp.eq.s32.totalorder %s23, 0
      %p97 = por %p95, %p96
      %s98 = ssub.s32 %s17, %s24
      %p99 = scmp.eq.s32.totalorder %s98, 0
      %s101 = sadd.s32 %s100, 1
      %s102 = scalar_select %p99, %s100, %s101
      %p105 = pneg %p99
      %p106 = scmp.eq.s32.totalorder %s17, 1
      %p107 = por %p105, %p106
      %p108 = scmp.ne.s32.totalorder %s100, %s103
      %p109 = scmp.eq.s32.totalorder %s17, 0
      %p110 = por %p108, %p109
      %p111 = scmp.ne.s32.totalorder %s100, %s103
      %p112 = scmp.eq.s32.totalorder %s22, 1
      %p113 = por %p111, %p112
      %p114 = scmp.ne.s32.totalorder %s103, %s104
      %p115 = scmp.eq.s32.totalorder %s22, 0
      %p116 = por %p114, %p115
      %p117 = scmp.ne.s32.totalorder %s103, %s104
      %p118 = scmp.eq.s32.totalorder %s23, 1
      %p119 = por %p117, %p118
      %p121 = scmp.ne.s32.totalorder %s104, %s120
      %p122 = scmp.eq.s32.totalorder %s23, 0
      %p123 = por %p121, %p122
      %s124 = ssub.s32 %s17, %s24
      %p125 = scmp.eq.s32.totalorder %s124, 0
      %s127 = sadd.s32 %s126, 1
      %s128 = scalar_select %p125, %s126, %s127
      %p131 = pneg %p125
      %p132 = scmp.eq.s32.totalorder %s17, 1
      %p133 = por %p131, %p132
      %p134 = scmp.ne.s32.totalorder %s126, %s129
      %p135 = scmp.eq.s32.totalorder %s17, 0
      %p136 = por %p134, %p135
      %p137 = scmp.ne.s32.totalorder %s126, %s129
      %p138 = scmp.eq.s32.totalorder %s22, 1
      %p139 = por %p137, %p138
      %p140 = scmp.ne.s32.totalorder %s129, %s130
      %p141 = scmp.eq.s32.totalorder %s22, 0
      %p142 = por %p140, %p141
      %p143 = scmp.ne.s32.totalorder %s129, %s130
      %p144 = scmp.eq.s32.totalorder %s23, 1
      %p145 = por %p143, %p144
      %p147 = scmp.ne.s32.totalorder %s130, %s146
      %p148 = scmp.eq.s32.totalorder %s23, 0
      %p149 = por %p147, %p148
      %p150 = scmp.le.s32.totalorder 1, %s17
      %p151 = scmp.lt.s32.totalorder %s17, 3
      %p152 = pnand %p150, %p151
      %p153 = pneg %p152
      // Predicated region
      $region9: #{tpu_custom_call.1} parent=5 // pred_check
        _
      $region10: #{tpu_custom_call.1} parent=5 // pred_check_branch
        %155 = sbr.rel (%p152) target = $region12
      $region11: #{tpu_custom_call.1} parent=5 // pred_region
        %s156 = ssub.s32 %s17, 1
        // Predicated region
        $region13: #{tpu_custom_call.1} parent=11 // pred_check
          %p157 = pneg %p64
        $region14: #{tpu_custom_call.1} parent=11 // pred_check_branch
          %159 = sbr.rel (%p157) target = $region16
        $region15: #{tpu_custom_call.1} parent=11 // pred_region
          _
        $region16: #{tpu_custom_call.1} parent=11 // pred_fallthru
          _
      $region12: #{tpu_custom_call.1} parent=5 // pred_fallthru
        _
      %p160 = scmp.lt.s32.totalorder %s17, 2
      // Predicated region
      $region17: #{tpu_custom_call.1} parent=5 // pred_check
        %p161 = pneg %p160
      $region18: #{tpu_custom_call.1} parent=5 // pred_check_branch
        %163 = sbr.rel (%p161) target = $region20
      $region19: #{tpu_custom_call.1} parent=5 // pred_region
        // Predicated region
        $region21: #{tpu_custom_call.1} parent=19 // pred_check
          %p164 = pneg %p37
        $region22: #{tpu_custom_call.1} parent=19 // pred_check_branch
          %166 = sbr.rel (%p164) target = $region24
        $region23: #{tpu_custom_call.1} parent=19 // pred_region
          %s167 = smul.u32 8, %s17
          %p168 = scmp.lt.s32.totalorder %s167, 15
          %s169 = scalar_select %p168, %s167, 15
          %s170 = smul.addr %s169, 4
          %s171 = scalar_lea.vmem %s0, %s170
          %s172 = smul.u32 8, %s17
        $region24: #{tpu_custom_call.1} parent=19 // pred_fallthru
          _
      $region20: #{tpu_custom_call.1} parent=5 // pred_fallthru
        _
      %p173 = scmp.le.s32.totalorder 1, %s17
      %p174 = scmp.lt.s32.totalorder %s17, 3
      %p175 = pnand %p173, %p174
      %p176 = pneg %p175
      // Predicated region
      $region25: #{tpu_custom_call.1} parent=5 // pred_check
        _
      $region26: #{tpu_custom_call.1} parent=5 // pred_check_branch
        %178 = sbr.rel (%p175) target = $region28
      $region27: #{tpu_custom_call.1} parent=5 // pred_region
        %s179 = ssub.s32 %s17, 1
        %s180 = smul.u32 8, %s22
        %p181 = scmp.lt.s32.totalorder %s180, 15
        %s182 = scalar_select %p181, %s180, 15
        %s183 = smul.addr %s182, 4
        %s184 = scalar_lea.vmem %s0, %s183
        %p185 = pneg %p43
        %p186 = pneg %p40
        %p187 = pneg %p64
        %p188 = pneg %p61
        %p189 = pneg %p90
        %p190 = pneg %p87
        %s191 = sand.u32 %s77, 1
        %s192 = scalar_lea.sflag [#allocation3], %s191
        %s193 = sand.u32 %s77, 1
        %s194 = smul.addr %s193, 32
        %s195 = scalar_lea.vmem [#allocation2], %s194
        %p196 = pneg %p116
        %p197 = pneg %p113
        %s198 = sand.u32 %s22, 1
        %s199 = scalar_lea.sflag [#allocation5], %s198
        %s200 = sand.u32 %s103, 1
        %s201 = smul.addr %s200, 8
        %s202 = scalar_lea.vmem [#allocation4], %s201
        %p203 = pneg %p142
        %p204 = pneg %p139
        %s205 = sand.u32 %s22, 1
        %s206 = scalar_lea.sflag [#allocation5], %s205
        %s207 = sand.u32 %s129, 1
        %s208 = smul.addr %s207, 8
        %s209 = scalar_lea.vmem [#allocation6], %s208
        %s210 = smul.u32 8, %s22
        %p211 = scmp.lt.s32.totalorder %s210, 15
        %s212 = scalar_select %p211, %s210, 15
        %s213 = smul.addr %s212, 4
        %s214 = scalar_lea.vmem %s0, %s213
        %s215 = smul.u32 8, %s22
        %s216 = smul.u32 8, %s22
        %v218 = vld [vmem:[%s214] sm:$0xf]
        %v219 = vld [vmem:[%s214 + $0x4] sm:$0xf]
        %v220 = vld [vmem:[%s214 + $0x8] sm:$0xf]
        %v221 = vld [vmem:[%s214 + $0xc] sm:$0xf]
        %v222 = vld [vmem:[%s214 + $0x10] sm:$0xf]
        %v223 = vld [vmem:[%s214 + $0x14] sm:$0xf]
        %v224 = vld [vmem:[%s214 + $0x18] sm:$0xf]
        %v225 = vld [vmem:[%s214 + $0x1c] sm:$0xf]
        %v226 = vld [vmem:[%s1] sm:$0xf]
        %v227 = vld [vmem:[%s1 + $0x4] sm:$0xf]
        %v228 = vld [vmem:[%s1 + $0x8] sm:$0xf]
        %v229 = vld [vmem:[%s1 + $0xc] sm:$0xf]
        %v230 = vld [vmem:[%s1 + $0x10] sm:$0xf]
        %v231 = vld [vmem:[%s1 + $0x14] sm:$0xf]
        %v232 = vld [vmem:[%s1 + $0x18] sm:$0xf]
        %v233 = vld [vmem:[%s1 + $0x1c] sm:$0xf]
        %v242 = vunpack.c.l.b16 %v218
        %v243 = vunpack.c.l.b16 %v219
        %v244 = vunpack.c.l.b16 %v220
        %v245 = vunpack.c.l.b16 %v221
        %v246 = vunpack.c.l.b16 %v222
        %v247 = vunpack.c.l.b16 %v223
        %v248 = vunpack.c.l.b16 %v224
        %v249 = vunpack.c.l.b16 %v225
        %v250 = vpack.c.b16 %v243, %v242
        %v251 = vpack.c.b16 %v245, %v244
        %v252 = vpack.c.b16 %v247, %v246
        %v253 = vpack.c.b16 %v249, %v248
        %v262 = vunpack.c.l.b16 %v226
        %v263 = vunpack.c.l.b16 %v227
        %v264 = vunpack.c.l.b16 %v228
        %v265 = vunpack.c.l.b16 %v229
        %v266 = vunpack.c.l.b16 %v230
        %v267 = vunpack.c.l.b16 %v231
        %v268 = vunpack.c.l.b16 %v232
        %v269 = vunpack.c.l.b16 %v233
        %v270 = vpack.c.b16 %v263, %v262
        %v271 = vpack.c.b16 %v265, %v264
        %v272 = vpack.c.b16 %v267, %v266
        %v273 = vpack.c.b16 %v269, %v268
        %vm278 = vcmask 523264
        %v280 = vsel %vm278, %v250, 0
        %v283 = vsel %vm278, %v251, 0
        %v286 = vsel %vm278, %v252, 0
        %v289 = vsel %vm278, %v253, 0
        %291 = vmatprep.subr.bf16.mxu0 0
        %292 = vmatpush1.bf16.msra.mxu0 0
        %293 = vmatprep.subr.bf16.mxu0 0
        %294 = vmatpush1.bf16.msra.mxu0 0
        %295 = vmatprep.subr.bf16.mxu0 0
        %296 = vmatpush1.bf16.msra.mxu0 0
        %297 = vmatprep.subr.bf16.mxu0 0
        %298 = vmatpush1.bf16.msra.mxu0 0
        %299 = vmatprep.subr.bf16.mxu0 0
        %300 = vmatpush1.bf16.msra.mxu0 %v273
        %301 = vmatprep.subr.bf16.mxu0 0
        %302 = vmatpush1.bf16.msra.mxu0 %v272
        %303 = vmatprep.subr.bf16.mxu0 0
        %304 = vmatpush1.bf16.msra.mxu0 %v271
        %305 = vmatprep.subr.bf16.mxu0 0
        %306 = vmatpush1.bf16.msra.mxu0 %v270
        %307 = vmatprep.subr.bf16.mxu0 0
        %308 = vmatpush2.bf16.msra.mxu0 0
        %309 = vmatprep.subr.bf16.mxu0 0
        %310 = vmatpush2.bf16.msra.mxu0 0
        %311 = vmatprep.subr.bf16.mxu0 0
        %312 = vmatpush2.bf16.msra.mxu0 0
        %313 = vmatprep.subr.bf16.mxu0 0
        %314 = vmatpush2.bf16.msra.mxu0 0
        %315 = vmatprep.subr.bf16.mxu0 0
        %316 = vmatpush2.bf16.msra.mxu0 0
        %317 = vmatprep.subr.bf16.mxu0 0
        %318 = vmatpush2.bf16.msra.mxu0 0
        %319 = vmatprep.subr.bf16.mxu0 0
        %320 = vmatpush2.bf16.msra.mxu0 0
        %321 = vmatprep.subr.bf16.mxu0 0
        %322 = vmatpush2.bf16.msra.mxu0 0
        %323 = vmatprep.mubr.bf16.mxu0 0
        %324 = vmatmul.mubr.bf16.gmra.mxu0 %v280
        %v325 = vpop.f32.mrf.mxu0
        %v326 = vadd.f32 0.0, %v325
        %v327 = vpop.f32.mrf.mxu0
        %v328 = vpop.f32.mrf.mxu0
        %v329 = vadd.f32 0.0, %v328
        %v330 = vpop.f32.mrf.mxu0
        %331 = vmatprep.mubr.bf16.mxu0 0
        %332 = vmatmul.mubr.bf16.gmra.mxu0 %v283
        %v333 = vpop.f32.mrf.mxu0
        %v334 = vadd.f32 0.0, %v333
        %v335 = vpop.f32.mrf.mxu0
        %v336 = vpop.f32.mrf.mxu0
        %v337 = vadd.f32 0.0, %v336
        %v338 = vpop.f32.mrf.mxu0
        %339 = vmatprep.mubr.bf16.mxu0 0
        %340 = vmatmul.mubr.bf16.gmra.mxu0 %v286
        %v341 = vpop.f32.mrf.mxu0
        %v342 = vadd.f32 0.0, %v341
        %v343 = vpop.f32.mrf.mxu0
        %v344 = vpop.f32.mrf.mxu0
        %v345 = vadd.f32 0.0, %v344
        %v346 = vpop.f32.mrf.mxu0
        %347 = vmatprep.mubr.bf16.mxu0 0
        %348 = vmatmul.mubr.bf16.gmra.mxu0 %v289
        %v349 = vpop.f32.mrf.mxu0
        %v350 = vadd.f32 0.0, %v349
        %v351 = vpop.f32.mrf.mxu0
        %v352 = vpop.f32.mrf.mxu0
        %v353 = vadd.f32 0.0, %v352
        %v354 = vpop.f32.mrf.mxu0
        %355 = vdwg.mxu0
        %v356 = vpack.c.bf16 %v329, %v326
        %v357 = vpack.c.bf16 %v337, %v334
        %v358 = vpack.c.bf16 %v345, %v342
        %v359 = vpack.c.bf16 %v353, %v350
        %v364 = vunpack.c.l.b16 %v356
        %v365 = vunpack.c.h.b16 %v356
        %v366 = vunpack.c.l.b16 %v357
        %v367 = vunpack.c.h.b16 %v357
        %v368 = vunpack.c.l.b16 %v358
        %v369 = vunpack.c.h.b16 %v358
        %v370 = vunpack.c.l.b16 %v359
        %v371 = vunpack.c.h.b16 %v359
        %v372 = vpack.c.b16 %v364, %v364
        %v373 = vpack.c.b16 %v365, %v365
        %v374 = vpack.c.b16 %v366, %v366
        %v375 = vpack.c.b16 %v367, %v367
        %v376 = vpack.c.b16 %v368, %v368
        %v377 = vpack.c.b16 %v369, %v369
        %v378 = vpack.c.b16 %v370, %v370
        %v379 = vpack.c.b16 %v371, %v371
        %388 = vst [vmem:[%s195] sm:$0xf] %v372
        %389 = vst [vmem:[%s195 + $0x4] sm:$0xf] %v373
        %390 = vst [vmem:[%s195 + $0x8] sm:$0xf] %v374
        %391 = vst [vmem:[%s195 + $0xc] sm:$0xf] %v375
        %392 = vst [vmem:[%s195 + $0x10] sm:$0xf] %v376
        %393 = vst [vmem:[%s195 + $0x14] sm:$0xf] %v377
        %394 = vst [vmem:[%s195 + $0x18] sm:$0xf] %v378
        %395 = vst [vmem:[%s195 + $0x1c] sm:$0xf] %v379
        %v396 = vadd.f32 %v326, %v329
        %v397 = vadd.f32 %v396, %v334
        %v398 = vadd.f32 %v397, %v337
        %v399 = vadd.f32 %v398, %v342
        %v400 = vadd.f32 %v399, %v345
        %v401 = vadd.f32 %v400, %v350
        %v402 = vadd.f32 %v401, %v353
        %403 = vst [vmem:[%s202] sm:$0xff] %v402
        %v404 = vmul.f32 %v326, %v326
        %v405 = vmul.f32 %v329, %v329
        %v406 = vmul.f32 %v334, %v334
        %v407 = vmul.f32 %v337, %v337
        %v408 = vmul.f32 %v342, %v342
        %v409 = vmul.f32 %v345, %v345
        %v410 = vmul.f32 %v350, %v350
        %v411 = vmul.f32 %v353, %v353
        %v412 = vadd.f32 %v404, %v405
        %v413 = vadd.f32 %v412, %v406
        %v414 = vadd.f32 %v413, %v407
        %v415 = vadd.f32 %v414, %v408
        %v416 = vadd.f32 %v415, %v409
        %v417 = vadd.f32 %v416, %v410
        %v418 = vadd.f32 %v417, %v411
        %419 = vst [vmem:[%s209] sm:$0xff] %v418
        %s420 = sand.u32 %s77, 1
        %s421 = scalar_lea.sflag [#allocation3], %s420
        %s422 = sand.u32 %s77, 1
        %s423 = smul.addr %s422, 32
        %s424 = scalar_lea.vmem [#allocation2], %s423
        %s425 = sand.u32 %s22, 1
        %s426 = scalar_lea.sflag [#allocation5], %s425
        %s427 = sand.u32 %s103, 1
        %s428 = smul.addr %s427, 8
        %s429 = scalar_lea.vmem [#allocation4], %s428
        %s430 = sand.u32 %s22, 1
        %s431 = scalar_lea.sflag [#allocation5], %s430
        %s432 = sand.u32 %s129, 1
        %s433 = smul.addr %s432, 8
        %s434 = scalar_lea.vmem [#allocation6], %s433
        // Predicated region
        $region29: #{tpu_custom_call.1} parent=27 // pred_check
          %p435 = pneg %p87
        $region30: #{tpu_custom_call.1} parent=27 // pred_check_branch
          %437 = sbr.rel (%p435) target = $region32
        $region31: #{tpu_custom_call.1} parent=27 // pred_region
          %s438 = smul.u32 8, %s22
          %s440 = ssub.s32 512, 512
          %441 = vsyncadd %s421, %s440
          %s442 = smul.addr %s438, 64
          %s443 = scalar_lea.hbm %s2, %s442
          %s444 = sshll.u32 %s424, 4
          %s445 = int_to_ptr.vmem [resolvable:$true] %s444
          %450 = dma.vmem_to_hbm [thread:$0]  %s445, 512, %s443, %s421, 64, 64, 4
        $region32: #{tpu_custom_call.1} parent=27 // pred_fallthru
          _
        // Predicated region
        $region33: #{tpu_custom_call.1} parent=27 // pred_check
          %p451 = pneg %p113
        $region34: #{tpu_custom_call.1} parent=27 // pred_check_branch
          %453 = sbr.rel (%p451) target = $region36
        $region35: #{tpu_custom_call.1} parent=27 // pred_region
          %s455 = ssub.s32 128, 128
          %456 = vsyncadd %s426, %s455
          %s457 = smul.addr %s22, 128
          %s458 = scalar_lea.hbm %s3, %s457
          %s460 = sshll.u32 %s429, 4
          %s461 = int_to_ptr.vmem [resolvable:$true] %s460
          %463 = dma.vmem_to_hbm [thread:$0]  %s461, 128, %s458, %s426
        $region36: #{tpu_custom_call.1} parent=27 // pred_fallthru
          _
        // Predicated region
        $region37: #{tpu_custom_call.1} parent=27 // pred_check
          %p464 = pneg %p139
        $region38: #{tpu_custom_call.1} parent=27 // pred_check_branch
          %466 = sbr.rel (%p464) target = $region40
        $region39: #{tpu_custom_call.1} parent=27 // pred_region
          %s468 = ssub.s32 128, 128
          %469 = vsyncadd %s431, %s468
          %s470 = smul.addr %s22, 128
          %s471 = scalar_lea.hbm %s4, %s470
          %s473 = sshll.u32 %s434, 4
          %s474 = int_to_ptr.vmem [resolvable:$true] %s473
          %476 = dma.vmem_to_hbm [thread:$0]  %s474, 128, %s471, %s431
        $region40: #{tpu_custom_call.1} parent=27 // pred_fallthru
          _
      $region28: #{tpu_custom_call.1} parent=5 // pred_fallthru
        _
      %p477 = scmp.le.s32.totalorder 2, %s17
      // Predicated region
      $region41: #{tpu_custom_call.1} parent=5 // pred_check
        %p478 = pneg %p477
      $region42: #{tpu_custom_call.1} parent=5 // pred_check_branch
        %480 = sbr.rel (%p478) target = $region44
      $region43: #{tpu_custom_call.1} parent=5 // pred_region
        %s481 = ssub.s32 %s17, 2
        // Predicated region
        $region45: #{tpu_custom_call.1} parent=43 // pred_check
          %p482 = pneg %p93
        $region46: #{tpu_custom_call.1} parent=43 // pred_check_branch
          %484 = sbr.rel (%p482) target = $region48
        $region47: #{tpu_custom_call.1} parent=43 // pred_region
          %s485 = sand.u32 %s78, 1
          %s486 = scalar_lea.sflag [#allocation3], %s485
          %s487 = sand.u32 %s78, 1
          %s488 = smul.addr %s487, 32
          %s489 = scalar_lea.vmem [#allocation2], %s488
          %490 = dma.done %s486, 512
        $region48: #{tpu_custom_call.1} parent=43 // pred_fallthru
          _
        // Predicated region
        $region49: #{tpu_custom_call.1} parent=43 // pred_check
          %p491 = pneg %p119
        $region50: #{tpu_custom_call.1} parent=43 // pred_check_branch
          %493 = sbr.rel (%p491) target = $region52
        $region51: #{tpu_custom_call.1} parent=43 // pred_region
          %s494 = sand.u32 %s23, 1
          %s495 = scalar_lea.sflag [#allocation5], %s494
          %s496 = sand.u32 %s104, 1
          %s497 = smul.addr %s496, 8
          %s498 = scalar_lea.vmem [#allocation4], %s497
          %499 = dma.done %s495, 128
        $region52: #{tpu_custom_call.1} parent=43 // pred_fallthru
          _
        // Predicated region
        $region53: #{tpu_custom_call.1} parent=43 // pred_check
          %p500 = pneg %p145
        $region54: #{tpu_custom_call.1} parent=43 // pred_check_branch
          %502 = sbr.rel (%p500) target = $region56
        $region55: #{tpu_custom_call.1} parent=43 // pred_region
          %s503 = sand.u32 %s23, 1
          %s504 = scalar_lea.sflag [#allocation5], %s503
          %s505 = sand.u32 %s130, 1
          %s506 = smul.addr %s505, 8
          %s507 = scalar_lea.vmem [#allocation6], %s506
          %508 = dma.done %s504, 128
        $region56: #{tpu_custom_call.1} parent=43 // pred_fallthru
          _
      $region44: #{tpu_custom_call.1} parent=5 // pred_fallthru
        _
    $region6: #{tpu_custom_call.1} parent=1 // loop_footer
      %s21 = sadd.s32 1, %s17
    $region7: #{tpu_custom_call.1} parent=1 // loop_footer_branch
      %16 = sbr.rel target = $region3
    $region8: #{tpu_custom_call.1} parent=1 // loop_exit
      _
    %509 = vsyncpa [#allocation3], 1
    %s510 = scalar_lea.sflag [#allocation3], 1
    %511 = vsyncpa %s510, 1
    %512 = vsyncpa [#allocation5], 1
    %s513 = scalar_lea.sflag [#allocation5], 1
    %514 = vsyncpa %s513, 1

</llo_original>
